<compile_context>
chip_gen: v7x
topology: tpu7x:2x2x1
jax: 0.10.0
libtpu: 0.0.40
codegen_flags: <defaults>
</compile_context>

<pallas_src>
import functools

import jax
import jax.numpy as jnp
from jax.experimental import pallas as pl
from jax.experimental.pallas import tpu as pltpu

EPS = 1e-5

# Budget for the six live pipeline blocks (x, y, out, each double-buffered),
# counted in f32 bytes. Kept well under the 48 MiB scoped-VMEM limit below so
# in-kernel f32 temporaries also fit (safe on v5e/v6e 128 MiB and v7x 64 MiB).
_TILE_BUDGET_BYTES = 16 * 1024 * 1024
_VMEM_LIMIT_BYTES = 48 * 1024 * 1024


def _adain_kernel(x_ref, y_ref, o_ref, *, hw_x, hw_y):
    # x_ref: (TR, HWx_padded), y_ref: (TR, HWy_padded), o_ref: (TR, HWx_padded)
    # hw_x / hw_y are the TRUE (unpadded) spatial element counts; padded
    # columns are zeros, so sums / sums-of-squares are unaffected.
    x = x_ref[...].astype(jnp.float32)
    y = y_ref[...].astype(jnp.float32)

    # One-pass content statistics (sum + sum of squares), unbiased variance.
    x_sum = jnp.sum(x, axis=-1, keepdims=True)
    x_sq = jnp.sum(x * x, axis=-1, keepdims=True)
    x_mean = x_sum * (1.0 / hw_x)
    x_var = (x_sq - x_mean * x_sum) * (1.0 / max(hw_x - 1, 1))
    inv_x_std = pl.reciprocal(jnp.sqrt(x_var + EPS), approx=False)

    # One-pass style statistics — note the divisor uses the style's own size.
    y_sum = jnp.sum(y, axis=-1, keepdims=True)
    y_sq = jnp.sum(y * y, axis=-1, keepdims=True)
    y_mean = y_sum * (1.0 / hw_y)
    y_var = (y_sq - y_mean * y_sum) * (1.0 / max(hw_y - 1, 1))
    y_std = jnp.sqrt(y_var + EPS)

    # Fused normalize: out = (x - mu_x)/sigma_x * sigma_y + mu_y
    #                      = x * scale + shift
    scale = y_std * inv_x_std          # (TR, 1)
    shift = y_mean - x_mean * scale    # (TR, 1)
    o_ref[...] = (x * scale + shift).astype(o_ref.dtype)


def _pad_lanes(a2):
    """Pad the last (lane) dim up to a multiple of 128 with zeros."""
    hw = a2.shape[-1]
    pad = (-hw) % 128
    if pad:
        a2 = jnp.pad(a2, ((0, 0), (0, pad)))
    return a2


@jax.jit
def adain(x, y):
    """x: content NCHW, y: style NCHW; (N, C) must match (spatial may differ)."""
    assert x.shape[:2] == y.shape[:2]
    n, c, h, w = x.shape
    hy, wy = y.shape[2], y.shape[3]
    hw_x, hw_y = h * w, hy * wy

    rows = n * c
    x2 = _pad_lanes(x.reshape(rows, hw_x))
    y2 = _pad_lanes(y.reshape(rows, hw_y))
    hw_xp = x2.shape[-1]
    hw_yp = y2.shape[-1]

    # Row-tile sizing: six double-buffered pipeline blocks, budgeted in f32.
    bytes_per_row = 2 * (2 * hw_xp + hw_yp) * 4
    tr = max(_TILE_BUDGET_BYTES // bytes_per_row, 8)
    tr = (tr // 8) * 8                  # sublane-aligned (f32 packing)
    if tr >= rows:
        tr = rows                       # single block along the row axis
    grid = (pl.cdiv(rows, tr),)         # partial last block is masked by Pallas

    kernel = functools.partial(_adain_kernel, hw_x=hw_x, hw_y=hw_y)

    out2 = pl.pallas_call(
        kernel,
        out_shape=jax.ShapeDtypeStruct((rows, hw_xp), x.dtype),
        grid_spec=pltpu.PrefetchScalarGridSpec(
            num_scalar_prefetch=0,
            grid=grid,
            in_specs=[
                pl.BlockSpec((tr, hw_xp), lambda i: (i, 0)),
                pl.BlockSpec((tr, hw_yp), lambda i: (i, 0)),
            ],
            out_specs=pl.BlockSpec((tr, hw_xp), lambda i: (i, 0)),
        ),
        compiler_params=pltpu.CompilerParams(
            dimension_semantics=("parallel",),
            vmem_limit_bytes=_VMEM_LIMIT_BYTES,
        ),
    )(x2, y2)

    if hw_xp != hw_x:
        out2 = out2[:, :hw_x]
    return out2.reshape(n, c, h, w)


def _adain_ref(x, y):
    """Pure-JAX reference mirroring the PyTorch module."""
    def stats(t):
        nn_, cc = t.shape[:2]
        flat = t.reshape(nn_, cc, -1).astype(jnp.float32)
        mean = flat.mean(axis=-1)
        var = flat.var(axis=-1, ddof=1)
        std = jnp.sqrt(var + EPS)
        return mean[:, :, None, None], std[:, :, None, None]

    xm, xs = stats(x)
    ym, ys = stats(y)
    return (((x.astype(jnp.float32) - xm) / xs) * ys + ym).astype(x.dtype)


if __name__ == "__main__":
    key = jax.random.PRNGKey(0)
    kx, ky, kz = jax.random.split(key, 3)

    # Case 1: content and style at the same resolution.
    x = jax.random.normal(kx, (2, 4, 16, 16), dtype=jnp.float32) * 2.0 + 0.5
    y = jax.random.normal(ky, (2, 4, 16, 16), dtype=jnp.float32) * 3.0 - 1.0
    out = jax.block_until_ready(adain(x, y))
    ref = _adain_ref(x, y)
    assert out.shape == x.shape and out.dtype == x.dtype
    assert jnp.allclose(out, ref, atol=1e-4, rtol=1e-4), "mismatch vs reference"

    # Case 2: style at a different spatial resolution (exercises the fixed
    # style-variance divisor and the lane-padding path).
    y_small = jax.random.normal(kz, (2, 4, 8, 8), dtype=jnp.float32) * 1.5 + 2.0
    out2 = jax.block_until_ready(adain(x, y_small))
    ref2 = _adain_ref(x, y_small)
    assert out2.shape == x.shape
    assert jnp.allclose(out2, ref2, atol=1e-4, rtol=1e-4), "mismatch vs reference (mixed res)"

    print("KERNEL_OK")
</pallas_src>

<mosaic_0001>
module attributes {stable_mosaic.version = 11 : i64} {
  func.func @_adain_kernel(%arg0: i32, %arg1: memref<8x256xf32, #tpu.memory_space<vmem>>, %arg2: memref<8x256xf32, #tpu.memory_space<vmem>>, %arg3: memref<8x256xf32, #tpu.memory_space<vmem>>) attributes {dimension_semantics = [#tpu.dimension_semantics<parallel>], iteration_bounds = array<i64: 1>, scalar_prefetch = 0 : i64, scratch_operands = 0 : i64, tpu.core_type = #tpu.core_type<tc>, window_params = [{transform_indices = @transform_0, window_bounds = array<i64: 8, 256>}, {transform_indices = @transform_1, window_bounds = array<i64: 8, 256>}, {transform_indices = @transform_2, window_bounds = array<i64: 8, 256>}]} {
    %c0 = arith.constant 0 : index
    %c0_0 = arith.constant 0 : index
    %0 = vector.load %arg1[%c0, %c0_0] : memref<8x256xf32, #tpu.memory_space<vmem>>, vector<8x256xf32>
    %c0_1 = arith.constant 0 : index
    %c0_2 = arith.constant 0 : index
    %1 = vector.load %arg2[%c0_1, %c0_2] : memref<8x256xf32, #tpu.memory_space<vmem>>, vector<8x256xf32>
    %cst = arith.constant dense<0.000000e+00> : vector<8xf32>
    %2 = vector.multi_reduction <add>, %0, %cst [1] : vector<8x256xf32> to vector<8xf32>
    %3 = vector.shape_cast %2 : vector<8xf32> to vector<8x1xf32>
    %4 = arith.mulf %0, %0 : vector<8x256xf32>
    %cst_3 = arith.constant dense<0.000000e+00> : vector<8xf32>
    %5 = vector.multi_reduction <add>, %4, %cst_3 [1] : vector<8x256xf32> to vector<8xf32>
    %6 = vector.shape_cast %5 : vector<8xf32> to vector<8x1xf32>
    %cst_4 = arith.constant 3.906250e-03 : f32
    %7 = vector.broadcast %cst_4 : f32 to vector<8x1xf32>
    %8 = arith.mulf %3, %7 : vector<8x1xf32>
    %9 = arith.mulf %8, %3 : vector<8x1xf32>
    %10 = arith.subf %6, %9 : vector<8x1xf32>
    %cst_5 = arith.constant 0.00392156886 : f32
    %11 = vector.broadcast %cst_5 : f32 to vector<8x1xf32>
    %12 = arith.mulf %10, %11 : vector<8x1xf32>
    %cst_6 = arith.constant 9.99999974E-6 : f32
    %13 = vector.broadcast %cst_6 : f32 to vector<8x1xf32>
    %14 = arith.addf %12, %13 : vector<8x1xf32>
    %15 = math.sqrt %14 : vector<8x1xf32>
    %16 = tpu.reciprocal %15 : vector<8x1xf32> -> vector<8x1xf32>
    %cst_7 = arith.constant dense<0.000000e+00> : vector<8xf32>
    %17 = vector.multi_reduction <add>, %1, %cst_7 [1] : vector<8x256xf32> to vector<8xf32>
    %18 = vector.shape_cast %17 : vector<8xf32> to vector<8x1xf32>
    %19 = arith.mulf %1, %1 : vector<8x256xf32>
    %cst_8 = arith.constant dense<0.000000e+00> : vector<8xf32>
    %20 = vector.multi_reduction <add>, %19, %cst_8 [1] : vector<8x256xf32> to vector<8xf32>
    %21 = vector.shape_cast %20 : vector<8xf32> to vector<8x1xf32>
    %cst_9 = arith.constant 3.906250e-03 : f32
    %22 = vector.broadcast %cst_9 : f32 to vector<8x1xf32>
    %23 = arith.mulf %18, %22 : vector<8x1xf32>
    %24 = arith.mulf %23, %18 : vector<8x1xf32>
    %25 = arith.subf %21, %24 : vector<8x1xf32>
    %cst_10 = arith.constant 0.00392156886 : f32
    %26 = vector.broadcast %cst_10 : f32 to vector<8x1xf32>
    %27 = arith.mulf %25, %26 : vector<8x1xf32>
    %cst_11 = arith.constant 9.99999974E-6 : f32
    %28 = vector.broadcast %cst_11 : f32 to vector<8x1xf32>
    %29 = arith.addf %27, %28 : vector<8x1xf32>
    %30 = math.sqrt %29 : vector<8x1xf32>
    %31 = arith.mulf %30, %16 : vector<8x1xf32>
    %32 = arith.mulf %8, %31 : vector<8x1xf32>
    %33 = arith.subf %23, %32 : vector<8x1xf32>
    %34 = vector.broadcast %31 : vector<8x1xf32> to vector<8x256xf32>
    %35 = arith.mulf %0, %34 : vector<8x256xf32>
    %36 = vector.broadcast %33 : vector<8x1xf32> to vector<8x256xf32>
    %37 = arith.addf %35, %36 : vector<8x256xf32>
    %c0_12 = arith.constant 0 : index
    %c0_13 = arith.constant 0 : index
    %38 = vector.load %arg3[%c0_12, %c0_13] : memref<8x256xf32, #tpu.memory_space<vmem>>, vector<8x256xf32>
    tpu.vector_store %arg3[%c0_12, %c0_13], %37 {strides = array<i32>} : memref<8x256xf32, #tpu.memory_space<vmem>>, vector<8x256xf32>,
    return
  }
  func.func @transform_0(%arg0: i32) -> (i32, i32) {
    %c0_i32 = arith.constant 0 : i32
    %c0_i32_0 = arith.constant 0 : i32
    return %arg0, %c0_i32 : i32, i32
  }
  func.func @transform_1(%arg0: i32) -> (i32, i32) {
    %c0_i32 = arith.constant 0 : i32
    %c0_i32_0 = arith.constant 0 : i32
    return %arg0, %c0_i32 : i32, i32
  }
  func.func @transform_2(%arg0: i32) -> (i32, i32) {
    %c0_i32 = arith.constant 0 : i32
    %c0_i32_0 = arith.constant 0 : i32
    return %arg0, %c0_i32 : i32, i32
  }
}

</mosaic_0001>

<llo_original>
// kernel: adain.1
$region0: #{adain.1}
  #allocation0 [shape = 'u32[]', space=smem, size = 0x4, offset = 0x4, fixed_abs, tag = 'smem constant byte address 0x4 - core index']
  #allocation1 [shape = 'u32[144,128]{1,0:T(1,128)}', space=vmem, size = 0x12000, scoped, tag = 'internal scratch']
  %s0 = inlined_call_operand.vmem [shape: f32[8,256], index: 0, kind: input, shape index: {}]
  %s1 = inlined_call_operand.vmem [shape: f32[8,256], index: 1, kind: input, shape index: {}]
  %s2 = inlined_call_operand.vmem [shape: f32[8,256], index: 2, kind: output, shape index: {}]
  %s3 = sld [smem:[#allocation0]]
  $region18: #{adain.1} parent=0
    _
  %s5 = ssub.s32 1, %s3
  %s6 = scalar_select 0, %s5, %s3
  // Predicated region
  $region2: #{adain.1} parent=0 // pred_check
    _
  $region3: #{adain.1} parent=0 // pred_check_branch
    %8 = sbr.rel (0) target = $region5
  $region4: #{adain.1} parent=0 // pred_region
    _
  $region5: #{adain.1} parent=0 // pred_fallthru
    _
  // Predicated region
  $region6: #{adain.1} parent=0 // pred_check
    _
  $region7: #{adain.1} parent=0 // pred_check_branch
    %10 = sbr.rel (0) target = $region9
  $region8: #{adain.1} parent=0 // pred_region
    _
  $region9: #{adain.1} parent=0 // pred_fallthru
    _
  %v11 = vld [vmem:[%s0] sm:$0xff]
  %v12 = vld [vmem:[%s0 + $0x8] sm:$0xff]
  %v13 = vld [vmem:[%s1] sm:$0xff]
  %v14 = vld [vmem:[%s1 + $0x8] sm:$0xff]
  %v15 = vadd.f32 %v11, %v12
  %16 = vadd.xlane.f32.xlu0 %v15
  %v17 = vpop.xlane.xlu0 %16
  %v18 = vmul.f32 %v11, %v11
  %v19 = vmul.f32 %v12, %v12
  %v20 = vadd.f32 %v18, %v19
  %21 = vadd.xlane.f32.xlu0 %v20
  %v22 = vpop.xlane.xlu0 %21
  %v23 = vmul.f32 %v17, 0.00390625
  %v24 = vmul.f32 %v23, %v17
  %v25 = vsub.f32 %v22, %v24
  %v26 = vmul.f32 %v25, 0.003921569
  %v27 = vadd.f32 %v26, 1e-05
  %v28 = vrsqrt.pop %v27
  %v29 = vmul.f32 %v27, %v28
  %vm30 = vcmp.eq.f32.partialorder %v27, inf
  %v31 = vsel %vm30, %v27, %v29
  %vm32 = vcmp.eq.f32.partialorder %v27, 0.0
  %v33 = vand.u32 %v27, 2147483648
  %v34 = vsel %vm32, %v33, %v31
  %v35 = vrcp.pop %v34
  %v36 = vadd.f32 %v13, %v14
  %37 = vadd.xlane.f32.xlu0 %v36
  %v38 = vpop.xlane.xlu0 %37
  %v39 = vmul.f32 %v13, %v13
  %v40 = vmul.f32 %v14, %v14
  %v41 = vadd.f32 %v39, %v40
  %42 = vadd.xlane.f32.xlu0 %v41
  %v43 = vpop.xlane.xlu0 %42
  %v44 = vmul.f32 %v38, 0.00390625
  %v45 = vmul.f32 %v44, %v38
  %v46 = vsub.f32 %v43, %v45
  %v47 = vmul.f32 %v46, 0.003921569
  %v48 = vadd.f32 %v47, 1e-05
  %v49 = vrsqrt.pop %v48
  %v50 = vmul.f32 %v48, %v49
  %vm51 = vcmp.eq.f32.partialorder %v48, inf
  %v52 = vsel %vm51, %v48, %v50
  %vm53 = vcmp.eq.f32.partialorder %v48, 0.0
  %v54 = vand.u32 %v48, 2147483648
  %v55 = vsel %vm53, %v54, %v52
  %v56 = vmul.f32 %v55, %v35
  %v57 = vmul.f32 %v23, %v56
  %v58 = vsub.f32 %v44, %v57
  %v59 = vmul.f32 %v11, %v56
  %v60 = vmul.f32 %v12, %v56
  %v61 = vadd.f32 %v59, %v58
  %v62 = vadd.f32 %v60, %v58
  %63 = vst [vmem:[%s2] sm:$0xff] %v61
  %64 = vst [vmem:[%s2 + $0x8] sm:$0xff] %v62
  // Predicated region
  $region10: #{adain.1} parent=0 // pred_check
    _
  $region11: #{adain.1} parent=0 // pred_check_branch
    %66 = sbr.rel (0) target = $region13
  $region12: #{adain.1} parent=0 // pred_region
    _
  $region13: #{adain.1} parent=0 // pred_fallthru
    _
  // Predicated region
  $region14: #{adain.1} parent=0 // pred_check
    _
  $region15: #{adain.1} parent=0 // pred_check_branch
    %68 = sbr.rel (0) target = $region17
  $region16: #{adain.1} parent=0 // pred_region
    _
  $region17: #{adain.1} parent=0 // pred_fallthru
    _

</llo_original>
